<compile_context>
chip_gen: v5e
topology: v5e:2x2
jax: 0.10.0
libtpu: 0.0.40
codegen_flags: <defaults>
</compile_context>

<pallas_src>
import functools

import jax
import jax.numpy as jnp
from jax import lax
from jax.experimental import pallas as pl
from jax.experimental.pallas import tpu as pltpu


EPS = 1e-5


def _round_up(n, m):
    return ((n + m - 1) // m) * m


def _addnorm_kernel(seed_ref, x_ref, gamma_ref, beta_ref, w_ref, b_ref, o_ref,
                    *, dropout_p, training, d_real):
    # ---- LayerNorm(x) over the real feature width (feature dim padded to Dp) ----
    # Padded columns of x are zero, so plain sums give the correct moments when
    # divided by the *real* feature count d_real (E[x^2] - mean^2 formulation).
    x = x_ref[...].astype(jnp.float32)                          # (tm, Dp)
    inv_d = jnp.float32(1.0 / d_real)
    mean = jnp.sum(x, axis=-1, keepdims=True) * inv_d
    msq = jnp.sum(x * x, axis=-1, keepdims=True) * inv_d
    var = jnp.maximum(msq - mean * mean, 0.0)
    xn = (x - mean) * lax.rsqrt(var + EPS)
    # gamma/beta are zero-padded -> y is exactly 0 in the padded columns.
    y = xn * gamma_ref[...] + beta_ref[...]

    # ---- sublayer(y): Linear(D, D); bf16 operands, f32 accumulation on the MXU ----
    s = jnp.dot(y.astype(jnp.bfloat16), w_ref[...],
                preferred_element_type=jnp.float32) + b_ref[...]

    # ---- dropout(s): counter-hash PRNG, integer-domain keep decision ----
    if training and dropout_p > 0.0:
        tm_blk, dp = s.shape
        row0 = pl.program_id(0) * tm_blk
        rid = lax.broadcasted_iota(jnp.int32, s.shape, 0) + row0
        cid = lax.broadcasted_iota(jnp.int32, s.shape, 1)
        h = rid * jnp.int32(dp) + cid                           # global element id
        h = h ^ (seed_ref[0] * jnp.int32(-1640531527))          # seed * 0x9E3779B9
        # lowbias32 avalanche mixer (int32 math; logical shifts emulated by masking)
        h = h ^ ((h >> 16) & jnp.int32(0xFFFF))
        h = h * jnp.int32(0x7FEB352D)
        h = h ^ ((h >> 15) & jnp.int32(0x1FFFF))
        h = h * jnp.int32(-2073384309)                          # 0x846CA68B as int32
        h = h ^ ((h >> 16) & jnp.int32(0xFFFF))
        # keep with probability (1 - p): compare low 31 bits against (1-p)*2^31
        thr = jnp.int32(min(int((1.0 - dropout_p) * 2147483648.0), 2147483647))
        keep = (h & jnp.int32(0x7FFFFFFF)) < thr
        s = jnp.where(keep, s * jnp.float32(1.0 / (1.0 - dropout_p)), jnp.float32(0.0))

    # ---- residual add ----
    o_ref[...] = (x + s).astype(o_ref.dtype)


def addnorm(x, gamma, beta, w, b, *, dropout_p=0.1, training=False, seed=0, tm=256):
    """x: (B, S, D) float32. Returns x + dropout(linear(layer_norm(x)))."""
    B, S, D = x.shape
    rows = B * S

    # Lane-dense feature padding (multiple of 128) and sublane-aligned row tiles.
    Dp = _round_up(D, 128)
    tm = _round_up(min(tm, _round_up(rows, 8)), 8)
    rows_p = _round_up(rows, tm)

    x2 = jnp.pad(x.reshape(rows, D), ((0, rows_p - rows), (0, Dp - D)))
    gamma_p = jnp.pad(gamma, ((0, 0), (0, Dp - D)))   # zeros in pad cols -> y = 0 there
    beta_p = jnp.pad(beta, ((0, 0), (0, Dp - D)))
    w_p = jnp.pad(w, ((0, Dp - D), (0, Dp - D))).astype(jnp.bfloat16)  # half DMA bytes
    b_p = jnp.pad(b, ((0, 0), (0, Dp - D)))
    seed_arr = jnp.array([seed], dtype=jnp.int32)

    kernel = functools.partial(_addnorm_kernel, dropout_p=float(dropout_p),
                               training=bool(training), d_real=int(D))

    # VMEM budget: double-buffered x/out f32 tiles + bf16 weight (+ small vectors).
    # Clamp under v7x's 64 MiB physical VMEM.
    tile_bytes = tm * Dp * 4
    need = 4 * tile_bytes + 2 * Dp * Dp * 2 + 8 * Dp * 4 + (1 << 20)
    vmem_limit = int(min(max(need, 32 * 1024 * 1024), 48 * 1024 * 1024))

    cost = pl.CostEstimate(
        flops=int(2 * rows_p * Dp * Dp + 10 * rows_p * Dp),
        transcendentals=int(rows_p),
        bytes_accessed=int(2 * rows_p * Dp * 4 + Dp * Dp * 2 + 3 * Dp * 4),
    )

    out = pl.pallas_call(
        kernel,
        out_shape=jax.ShapeDtypeStruct((rows_p, Dp), x.dtype),
        grid_spec=pltpu.PrefetchScalarGridSpec(
            num_scalar_prefetch=1,
            grid=(rows_p // tm,),
            in_specs=[
                pl.BlockSpec((tm, Dp), lambda i, seed: (i, 0)),   # x row tile
                pl.BlockSpec((1, Dp), lambda i, seed: (0, 0)),    # gamma (grid-invariant)
                pl.BlockSpec((1, Dp), lambda i, seed: (0, 0)),    # beta
                pl.BlockSpec((Dp, Dp), lambda i, seed: (0, 0)),   # linear weight (bf16)
                pl.BlockSpec((1, Dp), lambda i, seed: (0, 0)),    # linear bias
            ],
            out_specs=pl.BlockSpec((tm, Dp), lambda i, seed: (i, 0)),
        ),
        compiler_params=pltpu.CompilerParams(
            dimension_semantics=("parallel",),
            vmem_limit_bytes=vmem_limit,
        ),
        cost_estimate=cost,
    )(seed_arr, x2, gamma_p, beta_p, w_p, b_p)
    return out[:rows, :D].reshape(B, S, D)


def addnorm_ref(x, gamma, beta, w, b):
    """Pure-JAX reference for eval mode (dropout = identity); mirrors the
    kernel's bf16 matmul operands with f32 accumulation."""
    mean = x.mean(-1, keepdims=True)
    var = ((x - mean) ** 2).mean(-1, keepdims=True)
    xn = (x - mean) / jnp.sqrt(var + EPS)
    y = xn * gamma[0] + beta[0]
    s = jnp.dot(y.astype(jnp.bfloat16), w.astype(jnp.bfloat16),
                preferred_element_type=jnp.float32) + b[0]
    return x + s


if __name__ == "__main__":
    B, S, D = 2, 8, 32  # batch=2, seq=8, hidden(feature_dim)=32

    key = jax.random.PRNGKey(0)
    kx, kw, kb = jax.random.split(key, 3)

    x = jax.random.normal(kx, (B, S, D), dtype=jnp.float32)

    # LayerNorm(elementwise_affine=True) params, PyTorch default init: ones / zeros.
    gamma = jnp.ones((1, D), dtype=jnp.float32)
    beta = jnp.zeros((1, D), dtype=jnp.float32)

    # Example sublayer = Linear(D, D); weight stored as (D_in, D_out) so the
    # kernel computes y @ w + b (== y @ W_torch.T + b).
    w = jax.random.normal(kw, (D, D), dtype=jnp.float32) * (1.0 / jnp.sqrt(D))
    b = jax.random.normal(kb, (1, D), dtype=jnp.float32) * 0.01

    # Eval mode (dropout is identity) — check against pure-JAX reference.
    out_eval = addnorm(x, gamma, beta, w, b, dropout_p=0.1, training=False, seed=0)
    out_eval = jax.block_until_ready(out_eval)
    ref = addnorm_ref(x, gamma, beta, w, b)
    assert jnp.allclose(out_eval, ref, atol=1e-2, rtol=1e-2), "eval-mode mismatch"

    # Training mode — exercises the in-kernel hash-PRNG dropout path.
    out_train = addnorm(x, gamma, beta, w, b, dropout_p=0.1, training=True, seed=0)
    out_train = jax.block_until_ready(out_train)
    assert bool(jnp.all(jnp.isfinite(out_train)))
    # dropped positions yield exactly x (residual + 0); fraction should be ~p=0.1
    drop_frac = float(jnp.mean((out_train == x).astype(jnp.float32)))
    assert 0.01 < drop_frac < 0.35, f"dropout fraction off: {drop_frac}"

    print("KERNEL_OK")
</pallas_src>

<mosaic_0001>
module attributes {stable_mosaic.version = 11 : i64} {
  func.func @_addnorm_kernel(%arg0: i32, %arg1: memref<1xi32, #tpu.memory_space<smem>>, %arg2: memref<16x128xf32, #tpu.memory_space<vmem>>, %arg3: memref<1x128xf32, #tpu.memory_space<vmem>>, %arg4: memref<1x128xf32, #tpu.memory_space<vmem>>, %arg5: memref<128x128xbf16, #tpu.memory_space<vmem>>, %arg6: memref<1x128xf32, #tpu.memory_space<vmem>>, %arg7: memref<16x128xf32, #tpu.memory_space<vmem>>) attributes {dimension_semantics = [#tpu.dimension_semantics<parallel>], iteration_bounds = array<i64: 1>, scalar_prefetch = 1 : i64, scratch_operands = 0 : i64, tpu.core_type = #tpu.core_type<tc>, window_params = [{transform_indices = @transform_0, window_bounds = array<i64: 16, 128>}, {pipeline_mode = #tpu.pipeline_mode<synchronous>, transform_indices = @transform_1, window_bounds = array<i64: 1, 128>}, {pipeline_mode = #tpu.pipeline_mode<synchronous>, transform_indices = @transform_2, window_bounds = array<i64: 1, 128>}, {pipeline_mode = #tpu.pipeline_mode<synchronous>, transform_indices = @transform_3, window_bounds = array<i64: 128, 128>}, {pipeline_mode = #tpu.pipeline_mode<synchronous>, transform_indices = @transform_4, window_bounds = array<i64: 1, 128>}, {transform_indices = @transform_5, window_bounds = array<i64: 16, 128>}]} {
    %c0 = arith.constant 0 : index
    %c0_0 = arith.constant 0 : index
    %0 = vector.load %arg2[%c0, %c0_0] : memref<16x128xf32, #tpu.memory_space<vmem>>, vector<16x128xf32>
    %cst = arith.constant dense<0.000000e+00> : vector<16xf32>
    %1 = vector.multi_reduction <add>, %0, %cst [1] : vector<16x128xf32> to vector<16xf32>
    %2 = vector.shape_cast %1 : vector<16xf32> to vector<16x1xf32>
    %cst_1 = arith.constant 3.125000e-02 : f32
    %3 = vector.broadcast %cst_1 : f32 to vector<16x1xf32>
    %4 = arith.mulf %2, %3 : vector<16x1xf32>
    %5 = arith.mulf %0, %0 : vector<16x128xf32>
    %cst_2 = arith.constant dense<0.000000e+00> : vector<16xf32>
    %6 = vector.multi_reduction <add>, %5, %cst_2 [1] : vector<16x128xf32> to vector<16xf32>
    %7 = vector.shape_cast %6 : vector<16xf32> to vector<16x1xf32>
    %cst_3 = arith.constant 3.125000e-02 : f32
    %8 = vector.broadcast %cst_3 : f32 to vector<16x1xf32>
    %9 = arith.mulf %7, %8 : vector<16x1xf32>
    %10 = arith.mulf %4, %4 : vector<16x1xf32>
    %11 = arith.subf %9, %10 : vector<16x1xf32>
    %cst_4 = arith.constant 0.000000e+00 : f32
    %12 = vector.broadcast %cst_4 : f32 to vector<16x1xf32>
    %13 = arith.maximumf %11, %12 : vector<16x1xf32>
    %14 = vector.broadcast %4 : vector<16x1xf32> to vector<16x128xf32>
    %15 = arith.subf %0, %14 : vector<16x128xf32>
    %cst_5 = arith.constant 9.99999974E-6 : f32
    %16 = vector.broadcast %cst_5 : f32 to vector<16x1xf32>
    %17 = arith.addf %13, %16 : vector<16x1xf32>
    %18 = math.rsqrt %17 : vector<16x1xf32>
    %19 = vector.broadcast %18 : vector<16x1xf32> to vector<16x128xf32>
    %20 = arith.mulf %15, %19 : vector<16x128xf32>
    %c0_6 = arith.constant 0 : index
    %c0_7 = arith.constant 0 : index
    %21 = vector.load %arg3[%c0_6, %c0_7] : memref<1x128xf32, #tpu.memory_space<vmem>>, vector<1x128xf32>
    %22 = vector.broadcast %21 : vector<1x128xf32> to vector<16x128xf32>
    %23 = arith.mulf %20, %22 : vector<16x128xf32>
    %c0_8 = arith.constant 0 : index
    %c0_9 = arith.constant 0 : index
    %24 = vector.load %arg4[%c0_8, %c0_9] : memref<1x128xf32, #tpu.memory_space<vmem>>, vector<1x128xf32>
    %25 = vector.broadcast %24 : vector<1x128xf32> to vector<16x128xf32>
    %26 = arith.addf %23, %25 : vector<16x128xf32>
    %27 = arith.truncf %26 : vector<16x128xf32> to vector<16x128xbf16>
    %c0_10 = arith.constant 0 : index
    %c0_11 = arith.constant 0 : index
    %28 = vector.load %arg5[%c0_10, %c0_11] : memref<128x128xbf16, #tpu.memory_space<vmem>>, vector<128x128xbf16>
    %cst_12 = arith.constant dense<0.000000e+00> : vector<16x128xf32>
    %29 = tpu.matmul %27, %28, %cst_12 {dimension_numbers = #tpu.dot_dimension_numbers<[1], [0], [0], [1], [0, 0, 1, 1], [], []>} : vector<16x128xbf16>, vector<128x128xbf16>, vector<16x128xf32> -> vector<16x128xf32>
    %c0_13 = arith.constant 0 : index
    %c0_14 = arith.constant 0 : index
    %30 = vector.load %arg6[%c0_13, %c0_14] : memref<1x128xf32, #tpu.memory_space<vmem>>, vector<1x128xf32>
    %31 = vector.broadcast %30 : vector<1x128xf32> to vector<16x128xf32>
    %32 = arith.addf %29, %31 : vector<16x128xf32>
    %33 = arith.addf %0, %32 : vector<16x128xf32>
    %c0_15 = arith.constant 0 : index
    %c0_16 = arith.constant 0 : index
    %34 = vector.load %arg7[%c0_15, %c0_16] : memref<16x128xf32, #tpu.memory_space<vmem>>, vector<16x128xf32>
    tpu.vector_store %arg7[%c0_15, %c0_16], %33 {strides = array<i32>} : memref<16x128xf32, #tpu.memory_space<vmem>>, vector<16x128xf32>,
    return
  }
  func.func @transform_0(%arg0: i32, %arg1: memref<1xi32, #tpu.memory_space<smem>>) -> (i32, i32) {
    %c0_i32 = arith.constant 0 : i32
    %c0_i32_0 = arith.constant 0 : i32
    return %arg0, %c0_i32 : i32, i32
  }
  func.func @transform_1(%arg0: i32, %arg1: memref<1xi32, #tpu.memory_space<smem>>) -> (i32, i32) {
    %c0_i32 = arith.constant 0 : i32
    %c0_i32_0 = arith.constant 0 : i32
    %c0_i32_1 = arith.constant 0 : i32
    return %c0_i32, %c0_i32_0 : i32, i32
  }
  func.func @transform_2(%arg0: i32, %arg1: memref<1xi32, #tpu.memory_space<smem>>) -> (i32, i32) {
    %c0_i32 = arith.constant 0 : i32
    %c0_i32_0 = arith.constant 0 : i32
    %c0_i32_1 = arith.constant 0 : i32
    return %c0_i32, %c0_i32_0 : i32, i32
  }
  func.func @transform_3(%arg0: i32, %arg1: memref<1xi32, #tpu.memory_space<smem>>) -> (i32, i32) {
    %c0_i32 = arith.constant 0 : i32
    %c0_i32_0 = arith.constant 0 : i32
    %c0_i32_1 = arith.constant 0 : i32
    return %c0_i32, %c0_i32_0 : i32, i32
  }
  func.func @transform_4(%arg0: i32, %arg1: memref<1xi32, #tpu.memory_space<smem>>) -> (i32, i32) {
    %c0_i32 = arith.constant 0 : i32
    %c0_i32_0 = arith.constant 0 : i32
    %c0_i32_1 = arith.constant 0 : i32
    return %c0_i32, %c0_i32_0 : i32, i32
  }
  func.func @transform_5(%arg0: i32, %arg1: memref<1xi32, #tpu.memory_space<smem>>) -> (i32, i32) {
    %c0_i32 = arith.constant 0 : i32
    %c0_i32_0 = arith.constant 0 : i32
    return %arg0, %c0_i32 : i32, i32
  }
}

</mosaic_0001>

<llo_original>
// kernel: tpu_custom_call.1
$region0: #{tpu_custom_call.1}
  #allocation0 [shape = 'u32[]', space=smem, size = 0x4, offset = 0x4, fixed_abs, tag = 'smem constant byte address 0x4 - core index']
  #allocation1 [shape = 'u32[72,128]{1,0:T(1,128)}', space=vmem, size = 0x9000, scoped, tag = 'internal scratch']
  #allocation2 [shape = 's32[1]{0}', space=sflag, size = 0x4, scoped, tag = 'scoped memory for tpu_custom_call.1']
  #allocation3 [shape = 's32[1]{0:T(128)S(6)}', space=smem, size = 0x200, scoped, tag = 'prefetched SMEM operand 0']
  %s0 = inlined_call_operand.<no memory space> [shape: s32[1], index: 0, kind: input, shape index: {}]
  %s1 = inlined_call_operand.hbm [shape: f32[16,128], index: 1, kind: input, shape index: {}]
  %s2 = inlined_call_operand.vmem [shape: f32[1,128], index: 2, kind: input, shape index: {}]
  %s3 = inlined_call_operand.vmem [shape: f32[1,128], index: 3, kind: input, shape index: {}]
  %s4 = inlined_call_operand.hbm [shape: bf16[128,128], index: 4, kind: input, shape index: {}]
  %s5 = inlined_call_operand.vmem [shape: f32[1,128], index: 5, kind: input, shape index: {}]
  %s6 = inlined_call_operand.hbm [shape: f32[16,128], index: 6, kind: output, shape index: {}]
  %s7 = sld [smem:[#allocation0]]
  $region38: #{tpu_custom_call.1} parent=0
    _
  %s9 = ssub.s32 1, %s7
  %s10 = scalar_select 0, %s9, %s7
  %11 = sst [smem:[#allocation3]] %s0
  $region1: #{tpu_custom_call.1} parent=0
    #allocation4 [shape = 'u8[8192]{0}', space=vmem, size = 0x2000, scoped, tag = 'input window, operand 1, single buffered']
    #allocation5 [shape = 's32[1]{0}', space=sflag, size = 0x4, scoped, tag = 'scoped memory for tpu_custom_call.1']
    #allocation6 [shape = 's32[1]{0}', space=sflag, size = 0x4, scoped, tag = 'scoped memory for tpu_custom_call.1']
    #allocation7 [shape = 'u8[32768]{0}', space=vmem, size = 0x8000, scoped, tag = 'input window, operand 4, single buffered']
    #allocation8 [shape = 's32[1]{0}', space=sflag, size = 0x4, scoped, tag = 'scoped memory for tpu_custom_call.1']
    #allocation9 [shape = 'u8[8192]{0}', space=vmem, size = 0x2000, scoped, tag = 'output window, operand 0, single buffered']
    %12 = vsyncpa [#allocation5], 0
    %13 = vsyncpa [#allocation8], 0
    %14 = vsyncpa [#allocation6], 0
    // Predicated region
    $region2: #{tpu_custom_call.1} parent=1 // pred_check
      _
    $region3: #{tpu_custom_call.1} parent=1 // pred_check_branch
      %16 = sbr.rel (0) target = $region5
    $region4: #{tpu_custom_call.1} parent=1 // pred_region
      %18 = vsyncadd [#allocation5], 0
      %s19 = sshll.u32 %s1, 4
      %s20 = int_to_ptr.hbm [resolvable:$true] %s19
      %s21 = sshll.u32 [#allocation4], 4
      %s22 = int_to_ptr.vmem [resolvable:$true] %s21
      %27 = dma.hbm_to_vmem [thread:$0]  %s20, 256, %s22, [#allocation5], 128, 128, 8
    $region5: #{tpu_custom_call.1} parent=1 // pred_fallthru
      _
    // Predicated region
    $region6: #{tpu_custom_call.1} parent=1 // pred_check
      _
    $region7: #{tpu_custom_call.1} parent=1 // pred_check_branch
      %29 = sbr.rel (0) target = $region9
    $region8: #{tpu_custom_call.1} parent=1 // pred_region
      _
    $region9: #{tpu_custom_call.1} parent=1 // pred_fallthru
      _
    // Predicated region
    $region10: #{tpu_custom_call.1} parent=1 // pred_check
      _
    $region11: #{tpu_custom_call.1} parent=1 // pred_check_branch
      %31 = sbr.rel (0) target = $region13
    $region12: #{tpu_custom_call.1} parent=1 // pred_region
      _
    $region13: #{tpu_custom_call.1} parent=1 // pred_fallthru
      _
    // Predicated region
    $region14: #{tpu_custom_call.1} parent=1 // pred_check
      _
    $region15: #{tpu_custom_call.1} parent=1 // pred_check_branch
      %33 = sbr.rel (0) target = $region17
    $region16: #{tpu_custom_call.1} parent=1 // pred_region
      %35 = vsyncadd [#allocation8], 0
      %s36 = sshll.u32 %s4, 4
      %s37 = int_to_ptr.hbm [resolvable:$true] %s36
      %s38 = sshll.u32 [#allocation7], 4
      %s39 = int_to_ptr.vmem [resolvable:$true] %s38
      %44 = dma.hbm_to_vmem [thread:$0]  %s37, 1024, %s39, [#allocation8], 64, 64, 4
    $region17: #{tpu_custom_call.1} parent=1 // pred_fallthru
      _
    // Predicated region
    $region18: #{tpu_custom_call.1} parent=1 // pred_check
      _
    $region19: #{tpu_custom_call.1} parent=1 // pred_check_branch
      %46 = sbr.rel (0) target = $region21
    $region20: #{tpu_custom_call.1} parent=1 // pred_region
      _
    $region21: #{tpu_custom_call.1} parent=1 // pred_fallthru
      _
    // Predicated region
    $region22: #{tpu_custom_call.1} parent=1 // pred_check
      _
    $region23: #{tpu_custom_call.1} parent=1 // pred_check_branch
      %48 = sbr.rel (0) target = $region25
    $region24: #{tpu_custom_call.1} parent=1 // pred_region
      %50 = dma.done [#allocation5], 256
    $region25: #{tpu_custom_call.1} parent=1 // pred_fallthru
      _
    // Predicated region
    $region26: #{tpu_custom_call.1} parent=1 // pred_check
      _
    $region27: #{tpu_custom_call.1} parent=1 // pred_check_branch
      %52 = sbr.rel (0) target = $region29
    $region28: #{tpu_custom_call.1} parent=1 // pred_region
      %54 = dma.done [#allocation8], 1024
    $region29: #{tpu_custom_call.1} parent=1 // pred_fallthru
      _
    %v55 = vld [vmem:[#allocation4] sm:$0xff]
    %v56 = vld [vmem:[#allocation4 + $0x8] sm:$0xff]
    %57 = vadd.xlane.f32.xlu0 %v55
    %v58 = vpop.xlane.xlu0 %57
    %59 = vadd.xlane.f32.xlu0 %v56
    %v60 = vpop.xlane.xlu0 %59
    %v61 = vmul.f32 %v58, 0.03125
    %v62 = vmul.f32 %v60, 0.03125
    %v63 = vmul.f32 %v55, %v55
    %v64 = vmul.f32 %v56, %v56
    %65 = vadd.xlane.f32.xlu0 %v63
    %v66 = vpop.xlane.xlu0 %65
    %67 = vadd.xlane.f32.xlu0 %v64
    %v68 = vpop.xlane.xlu0 %67
    %v69 = vmul.f32 %v66, 0.03125
    %v70 = vmul.f32 %v68, 0.03125
    %v71 = vmul.f32 %v61, %v61
    %v72 = vmul.f32 %v62, %v62
    %v73 = vsub.f32 %v69, %v71
    %v74 = vsub.f32 %v70, %v72
    %v75 = vmax.f32 %v73, 0.0
    %v76 = vmax.f32 %v74, 0.0
    %v77 = vsub.f32 %v55, %v61
    %v78 = vsub.f32 %v56, %v62
    %v79 = vadd.f32 %v75, 1e-05
    %v80 = vadd.f32 %v76, 1e-05
    %v81 = vrsqrt.pop %v79
    %v82 = vmul.f32 %v81, %v79
    %v83 = vmul.f32 %v82, %v81
    %v84 = vmul.f32 0.5, %v83
    %v85 = vsub.f32 1.5, %v84
    %v86 = vmul.f32 %v81, %v85
    %vm87 = vweird.f32 %v79
    %vm88 = vweird.f32 %v81
    %vm89 = vmor %vm87, %vm88
    %v90 = vsel %vm89, %v81, %v86
    %v91 = vrsqrt.pop %v80
    %v92 = vmul.f32 %v91, %v80
    %v93 = vmul.f32 %v92, %v91
    %v94 = vmul.f32 0.5, %v93
    %v95 = vsub.f32 1.5, %v94
    %v96 = vmul.f32 %v91, %v95
    %vm97 = vweird.f32 %v80
    %vm98 = vweird.f32 %v91
    %vm99 = vmor %vm97, %vm98
    %v100 = vsel %vm99, %v91, %v96
    %v101 = vmul.f32 %v77, %v90
    %v102 = vmul.f32 %v78, %v100
    %v103 = vld [vmem:[%s2] sm:$0x1]
    %v105 = vperm.slane %v103, 0
    %v107 = vmul.f32 %v101, %v105
    %v108 = vmul.f32 %v102, %v105
    %v109 = vld [vmem:[%s3] sm:$0x1]
    %v111 = vperm.slane %v109, 0
    %v113 = vadd.f32 %v107, %v111
    %v114 = vadd.f32 %v108, %v111
    %v115 = vpack.c.bf16 %v114, %v113
    %v116 = vld [vmem:[#allocation7] sm:$0xf]
    %v117 = vld [vmem:[#allocation7 + $0x4] sm:$0xf]
    %v118 = vld [vmem:[#allocation7 + $0x8] sm:$0xf]
    %v119 = vld [vmem:[#allocation7 + $0xc] sm:$0xf]
    %v120 = vld [vmem:[#allocation7 + $0x10] sm:$0xf]
    %v121 = vld [vmem:[#allocation7 + $0x14] sm:$0xf]
    %v122 = vld [vmem:[#allocation7 + $0x18] sm:$0xf]
    %v123 = vld [vmem:[#allocation7 + $0x1c] sm:$0xf]
    %v124 = vld [vmem:[#allocation7 + $0x20] sm:$0xf]
    %v125 = vld [vmem:[#allocation7 + $0x24] sm:$0xf]
    %v126 = vld [vmem:[#allocation7 + $0x28] sm:$0xf]
    %v127 = vld [vmem:[#allocation7 + $0x2c] sm:$0xf]
    %v128 = vld [vmem:[#allocation7 + $0x30] sm:$0xf]
    %v129 = vld [vmem:[#allocation7 + $0x34] sm:$0xf]
    %v130 = vld [vmem:[#allocation7 + $0x38] sm:$0xf]
    %v131 = vld [vmem:[#allocation7 + $0x3c] sm:$0xf]
    %v132 = vld [vmem:[%s5] sm:$0x1]
    %v134 = vperm.slane %v132, 0
    %v152 = vunpack.c.l.b16 %v116
    %v153 = vunpack.c.l.b16 %v117
    %v154 = vunpack.c.l.b16 %v118
    %v155 = vunpack.c.l.b16 %v119
    %v156 = vunpack.c.l.b16 %v120
    %v157 = vunpack.c.l.b16 %v121
    %v158 = vunpack.c.l.b16 %v122
    %v159 = vunpack.c.l.b16 %v123
    %v160 = vunpack.c.l.b16 %v124
    %v161 = vunpack.c.l.b16 %v125
    %v162 = vunpack.c.l.b16 %v126
    %v163 = vunpack.c.l.b16 %v127
    %v164 = vunpack.c.l.b16 %v128
    %v165 = vunpack.c.l.b16 %v129
    %v166 = vunpack.c.l.b16 %v130
    %v167 = vunpack.c.l.b16 %v131
    %v168 = vpack.c.b16 %v153, %v152
    %v169 = vpack.c.b16 %v155, %v154
    %v170 = vpack.c.b16 %v157, %v156
    %v171 = vpack.c.b16 %v159, %v158
    %v172 = vpack.c.b16 %v161, %v160
    %v173 = vpack.c.b16 %v163, %v162
    %v174 = vpack.c.b16 %v165, %v164
    %v175 = vpack.c.b16 %v167, %v166
    %184 = vmatpush.bf16.msra.mxu0 %v175
    %185 = vmatpush.bf16.msra.mxu0 %v174
    %186 = vmatpush.bf16.msra.mxu0 %v173
    %187 = vmatpush.bf16.msra.mxu0 %v172
    %188 = vmatpush.bf16.msra.mxu0 %v171
    %189 = vmatpush.bf16.msra.mxu0 %v170
    %190 = vmatpush.bf16.msra.mxu0 %v169
    %191 = vmatpush.bf16.msra.mxu0 %v168
    %192 = vmatmul.bf16.gmra.mxu0 %v115
    %v193 = vpop.f32.mrf.mxu0
    %v194 = vadd.f32 %v134, %v193
    %v195 = vpop.f32.mrf.mxu0
    %v196 = vadd.f32 %v134, %v195
    %197 = vdwg.mxu0
    %v198 = vadd.f32 %v55, %v194
    %v199 = vadd.f32 %v56, %v196
    %200 = vst [vmem:[#allocation9] sm:$0xff] %v198
    %201 = vst [vmem:[#allocation9 + $0x8] sm:$0xff] %v199
    // Predicated region
    $region30: #{tpu_custom_call.1} parent=1 // pred_check
      _
    $region31: #{tpu_custom_call.1} parent=1 // pred_check_branch
      %203 = sbr.rel (0) target = $region33
    $region32: #{tpu_custom_call.1} parent=1 // pred_region
      %205 = vsyncadd [#allocation6], 0
      %s206 = sshll.u32 [#allocation9], 4
      %s207 = int_to_ptr.vmem [resolvable:$true] %s206
      %s208 = sshll.u32 %s6, 4
      %s209 = int_to_ptr.hbm [resolvable:$true] %s208
      %214 = dma.vmem_to_hbm [thread:$0]  %s207, 256, %s209, [#allocation6], 128, 128, 8
    $region33: #{tpu_custom_call.1} parent=1 // pred_fallthru
      _
    // Predicated region
    $region34: #{tpu_custom_call.1} parent=1 // pred_check
      _
    $region35: #{tpu_custom_call.1} parent=1 // pred_check_branch
      %216 = sbr.rel (0) target = $region37
    $region36: #{tpu_custom_call.1} parent=1 // pred_region
      %218 = dma.done [#allocation6], 256
    $region37: #{tpu_custom_call.1} parent=1 // pred_fallthru
      _
    %219 = vsyncpa [#allocation5], 1
    %220 = vsyncpa [#allocation8], 1
    %221 = vsyncpa [#allocation6], 1

</llo_original>
